<compile_context>
chip_gen: v7x
topology: tpu7x:2x2x1
jax: 0.10.0
libtpu: 0.0.40
codegen_flags: <defaults>
</compile_context>

<pallas_src>
import jax
import jax.numpy as jnp
from jax import lax
from jax.experimental import pallas as pl
from jax.experimental.pallas import tpu as pltpu

LANES = 128
SUBLANES = 8
CHUNK_ROWS = 256               # rows per in-kernel accumulation chunk
VMEM_INPUT_BUDGET = 24 << 20   # target bytes of double-buffered input tiles per step
NCORES = 2                     # megacore split of the reduction (v7x); no-op elsewhere


def _make_kernel(steps, nb, chunk, n_chunks, rem_rows, needs_gate):
    """Build the kernel with all sizing baked in as Python constants."""

    def _accum(num, den, yp, yt, w):
        # Upcast on the VPU; inputs stay in native dtype in HBM/VMEM.
        ypf = yp.astype(jnp.float32)
        ytf = yt.astype(jnp.float32)
        wf = w.astype(jnp.float32)
        d = ypf - ytf
        wd2 = (wf * d) * d
        wy2 = (wf * ytf) * ytf
        g = wd2.shape[0] // SUBLANES
        # Rows -> 8 sublanes via pure vreg adds (reshape is vreg-tile aligned,
        # so it is free; the reduce is plain VPU adds, no XLU).
        num = num + jnp.sum(wd2.reshape(g, SUBLANES, LANES), axis=0)
        den = den + jnp.sum(wy2.reshape(g, SUBLANES, LANES), axis=0)
        return num, den

    if n_chunks % 4 == 0:
        unroll = 4
    elif n_chunks % 2 == 0:
        unroll = 2
    else:
        unroll = 1

    def kernel(yp_ref, yt_ref, w_ref, out_ref, num_acc, den_acc):
        c = pl.program_id(0)   # parallel axis (TensorCore split)
        j = pl.program_id(1)   # sequential reduction axis

        @pl.when(j == 0)
        def _init():
            num_acc[...] = jnp.zeros_like(num_acc)
            den_acc[...] = jnp.zeros_like(den_acc)

        def _do_block():
            num = num_acc[...]
            den = den_acc[...]

            def chunk_body(ci, carry):
                base = pl.multiple_of(ci * chunk, chunk)
                return _accum(*carry,
                              yp_ref[pl.ds(base, chunk), :],
                              yt_ref[pl.ds(base, chunk), :],
                              w_ref[pl.ds(base, chunk), :])

            if n_chunks > 0:
                num, den = lax.fori_loop(0, n_chunks, chunk_body, (num, den),
                                         unroll=unroll)
            if rem_rows > 0:
                base = n_chunks * chunk
                num, den = _accum(num, den,
                                  yp_ref[pl.ds(base, rem_rows), :],
                                  yt_ref[pl.ds(base, rem_rows), :],
                                  w_ref[pl.ds(base, rem_rows), :])
            num_acc[...] = num
            den_acc[...] = den

        if needs_gate:
            # Only exists when nb doesn't split evenly over the cores: the
            # clamped, duplicated step contributes nothing.
            bi = c * steps + j
            pl.when(bi < nb)(_do_block)
        else:
            _do_block()

        @pl.when(j == steps - 1)
        def _finalize():
            # Single write of the resident (16,128) per-core output block.
            out_ref[0:SUBLANES, :] = num_acc[...]
            out_ref[SUBLANES:2 * SUBLANES, :] = den_acc[...]

    return kernel


def weighted_r2_loss(y_pred, y_true, weights, *, epsilon=1e-38):
    """Weighted R^2 loss: sum(w*(yp-yt)^2) / (sum(w*yt^2) + epsilon)."""
    yp = jnp.ravel(y_pred)
    yt = jnp.ravel(y_true)
    w = jnp.ravel(weights)
    n = yp.shape[0]

    itemsizes = [jnp.dtype(a.dtype).itemsize for a in (yp, yt, w)]
    # Sublane granularity that respects packed sub-32-bit layouts (8/16/32 rows).
    gran = max(SUBLANES, 32 // min(itemsizes))

    rows = n // LANES
    num = jnp.float32(0.0)
    den = jnp.float32(0.0)
    covered = 0

    if rows >= gran:
        # Tile sizing: ~VMEM_INPUT_BUDGET bytes of double-buffered inputs per step.
        max_tile_rows = VMEM_INPUT_BUDGET // (2 * LANES * sum(itemsizes))
        max_tile_rows = max(CHUNK_ROWS, max_tile_rows - max_tile_rows % CHUNK_ROWS)
        tile_rows = min(max_tile_rows, (rows // gran) * gran)
        nb = rows // tile_rows                  # number of FULL tiles the kernel handles
        covered = nb * tile_rows * LANES

        ncores = min(NCORES, nb)
        steps = pl.cdiv(nb, ncores)
        needs_gate = ncores * steps > nb

        chunk = min(CHUNK_ROWS, tile_rows)
        n_chunks = tile_rows // chunk
        rem_rows = tile_rows - n_chunks * chunk

        # Lane-aligned prefix as a (rows, 128) view; a no-op when n % 128 == 0.
        # TODO(synk): when n % 128 != 0 this prefix slice makes one copy; a
        # manual-DMA (memory_space=pl.ANY) variant could avoid it.
        yp2 = yp[:rows * LANES].reshape(rows, LANES)
        yt2 = yt[:rows * LANES].reshape(rows, LANES)
        w2 = w[:rows * LANES].reshape(rows, LANES)

        def in_map(c, j):
            # Clamp so the (rare) duplicated step still DMAs a valid block; its
            # contribution is dropped by the scalar pl.when gate in-kernel.
            return (jnp.minimum(c * steps + j, nb - 1), 0)

        in_spec = pl.BlockSpec((tile_rows, LANES), in_map)
        # One fused (num|den) (16,128) block per core; constant across the
        # reduction axis => stays resident in VMEM.
        out_spec = pl.BlockSpec((2 * SUBLANES, LANES), lambda c, j: (c, 0))
        out_sds = jax.ShapeDtypeStruct((ncores * 2 * SUBLANES, LANES), jnp.float32)

        vmem_limit = int(2 * tile_rows * LANES * sum(itemsizes) + (16 << 20))

        partials = pl.pallas_call(
            _make_kernel(steps, nb, chunk, n_chunks, rem_rows, needs_gate),
            out_shape=out_sds,
            grid_spec=pltpu.PrefetchScalarGridSpec(
                num_scalar_prefetch=0,
                grid=(ncores, steps),
                in_specs=[in_spec, in_spec, in_spec],
                out_specs=out_spec,
                scratch_shapes=[pltpu.VMEM((SUBLANES, LANES), jnp.float32),
                                pltpu.VMEM((SUBLANES, LANES), jnp.float32)],
            ),
            compiler_params=pltpu.CompilerParams(
                dimension_semantics=("parallel", "arbitrary"),
                vmem_limit_bytes=vmem_limit,
            ),
        )(yp2, yt2, w2)

        parts = partials.reshape(ncores, 2, SUBLANES, LANES)
        num = num + jnp.sum(parts[:, 0])
        den = den + jnp.sum(parts[:, 1])

    if covered < n:
        # Tail (< one tile + sub-128 remainder): tiny, handled directly by XLA.
        yp_t = yp[covered:].astype(jnp.float32)
        yt_t = yt[covered:].astype(jnp.float32)
        w_t = w[covered:].astype(jnp.float32)
        d = yp_t - yt_t
        num = num + jnp.sum((w_t * d) * d)
        den = den + jnp.sum((w_t * yt_t) * yt_t)

    # PyTorch adds 1e-38, which is subnormal in f32; TPUs flush subnormals to
    # zero, so clamp to the smallest normal f32 to keep the 0/0 guard working.
    eps = jnp.float32(max(float(epsilon), float(jnp.finfo(jnp.float32).tiny)))
    return num / (den + eps)


if __name__ == "__main__":
    key = jax.random.PRNGKey(0)
    k1, k2, k3 = jax.random.split(key, 3)

    shape = (2, 4, 16, 16)
    y_pred = jax.random.normal(k1, shape, dtype=jnp.float32)
    y_true = jax.random.normal(k2, shape, dtype=jnp.float32)
    weights = jax.random.uniform(k3, shape, dtype=jnp.float32)

    loss = jax.block_until_ready(weighted_r2_loss(y_pred, y_true, weights))

    # Pure-JAX reference check
    num_ref = jnp.sum(weights * (y_pred - y_true) ** 2)
    den_ref = jnp.sum(weights * y_true ** 2) + 1e-38
    ref = num_ref / den_ref
    assert jnp.allclose(loss, ref, rtol=1e-5, atol=1e-6), (loss, ref)

    print("KERNEL_OK")
</pallas_src>

<mosaic_0001>
module attributes {stable_mosaic.version = 11 : i64} {
  func.func @kernel(%arg0: i32, %arg1: i32, %arg2: memref<16x128xf32, #tpu.memory_space<vmem>>, %arg3: memref<16x128xf32, #tpu.memory_space<vmem>>, %arg4: memref<16x128xf32, #tpu.memory_space<vmem>>, %arg5: memref<16x128xf32, #tpu.memory_space<vmem>>, %arg6: memref<8x128xf32, #tpu.memory_space<vmem>>, %arg7: memref<8x128xf32, #tpu.memory_space<vmem>>) attributes {dimension_semantics = [#tpu.dimension_semantics<parallel>, #tpu.dimension_semantics<arbitrary>], iteration_bounds = array<i64: 1, 1>, scalar_prefetch = 0 : i64, scratch_operands = 2 : i64, tpu.core_type = #tpu.core_type<tc>, window_params = [{transform_indices = @transform_0, window_bounds = array<i64: 16, 128>}, {transform_indices = @transform_1, window_bounds = array<i64: 16, 128>}, {transform_indices = @transform_2, window_bounds = array<i64: 16, 128>}, {transform_indices = @transform_3, window_bounds = array<i64: 16, 128>}]} {
    %c0_i32 = arith.constant 0 : i32
    %0 = arith.cmpi eq, %arg1, %c0_i32 : i32
    %1 = arith.extui %0 : i1 to i32
    %c0_i32_0 = arith.constant 0 : i32
    %2 = arith.cmpi ne, %1, %c0_i32_0 : i32
    scf.if %2 {
      %cst_15 = arith.constant 0.000000e+00 : f32
      %29 = vector.broadcast %cst_15 : f32 to vector<8x128xf32>
      %c0_16 = arith.constant 0 : index
      %c0_17 = arith.constant 0 : index
      %30 = vector.load %arg6[%c0_16, %c0_17] : memref<8x128xf32, #tpu.memory_space<vmem>>, vector<8x128xf32>
      tpu.vector_store %arg6[%c0_16, %c0_17], %29 {strides = array<i32>} : memref<8x128xf32, #tpu.memory_space<vmem>>, vector<8x128xf32>,
      %cst_18 = arith.constant 0.000000e+00 : f32
      %31 = vector.broadcast %cst_18 : f32 to vector<8x128xf32>
      %c0_19 = arith.constant 0 : index
      %c0_20 = arith.constant 0 : index
      %32 = vector.load %arg7[%c0_19, %c0_20] : memref<8x128xf32, #tpu.memory_space<vmem>>, vector<8x128xf32>
      tpu.vector_store %arg7[%c0_19, %c0_20], %31 {strides = array<i32>} : memref<8x128xf32, #tpu.memory_space<vmem>>, vector<8x128xf32>,
    } else {
    }
    %c0 = arith.constant 0 : index
    %c0_1 = arith.constant 0 : index
    %3 = vector.load %arg6[%c0, %c0_1] : memref<8x128xf32, #tpu.memory_space<vmem>>, vector<8x128xf32>
    %c0_2 = arith.constant 0 : index
    %c0_3 = arith.constant 0 : index
    %4 = vector.load %arg7[%c0_2, %c0_3] : memref<8x128xf32, #tpu.memory_space<vmem>>, vector<8x128xf32>
    %c0_i32_4 = arith.constant 0 : i32
    %c16_i32 = arith.constant 16 : i32
    %5 = arith.muli %c0_i32_4, %c16_i32 : i32
    %6 = tpu.assume_multiple %5, 16 : i32
    %7 = arith.index_cast %6 : i32 to index
    %c0_5 = arith.constant 0 : index
    %8 = vector.load %arg2[%7, %c0_5] : memref<16x128xf32, #tpu.memory_space<vmem>>, vector<16x128xf32>
    %9 = arith.index_cast %6 : i32 to index
    %c0_6 = arith.constant 0 : index
    %10 = vector.load %arg3[%9, %c0_6] : memref<16x128xf32, #tpu.memory_space<vmem>>, vector<16x128xf32>
    %11 = arith.index_cast %6 : i32 to index
    %c0_7 = arith.constant 0 : index
    %12 = vector.load %arg4[%11, %c0_7] : memref<16x128xf32, #tpu.memory_space<vmem>>, vector<16x128xf32>
    %13 = arith.subf %8, %10 : vector<16x128xf32>
    %14 = arith.mulf %12, %13 : vector<16x128xf32>
    %15 = arith.mulf %14, %13 : vector<16x128xf32>
    %16 = arith.mulf %12, %10 : vector<16x128xf32>
    %17 = arith.mulf %16, %10 : vector<16x128xf32>
    %18 = vector.shape_cast %15 : vector<16x128xf32> to vector<2x8x128xf32>
    %cst = arith.constant dense<0.000000e+00> : vector<8x128xf32>
    %19 = vector.multi_reduction <add>, %18, %cst [0] : vector<2x8x128xf32> to vector<8x128xf32>
    %20 = arith.addf %3, %19 : vector<8x128xf32>
    %21 = vector.shape_cast %17 : vector<16x128xf32> to vector<2x8x128xf32>
    %cst_8 = arith.constant dense<0.000000e+00> : vector<8x128xf32>
    %22 = vector.multi_reduction <add>, %21, %cst_8 [0] : vector<2x8x128xf32> to vector<8x128xf32>
    %23 = arith.addf %4, %22 : vector<8x128xf32>
    %c1_i32 = arith.constant 1 : i32
    %c0_9 = arith.constant 0 : index
    %c0_10 = arith.constant 0 : index
    %24 = vector.load %arg6[%c0_9, %c0_10] : memref<8x128xf32, #tpu.memory_space<vmem>>, vector<8x128xf32>
    tpu.vector_store %arg6[%c0_9, %c0_10], %20 {strides = array<i32>} : memref<8x128xf32, #tpu.memory_space<vmem>>, vector<8x128xf32>,
    %c0_11 = arith.constant 0 : index
    %c0_12 = arith.constant 0 : index
    %25 = vector.load %arg7[%c0_11, %c0_12] : memref<8x128xf32, #tpu.memory_space<vmem>>, vector<8x128xf32>
    tpu.vector_store %arg7[%c0_11, %c0_12], %23 {strides = array<i32>} : memref<8x128xf32, #tpu.memory_space<vmem>>, vector<8x128xf32>,
    %c0_i32_13 = arith.constant 0 : i32
    %26 = arith.cmpi eq, %arg1, %c0_i32_13 : i32
    %27 = arith.extui %26 : i1 to i32
    %c0_i32_14 = arith.constant 0 : i32
    %28 = arith.cmpi ne, %27, %c0_i32_14 : i32
    scf.if %28 {
      %c0_15 = arith.constant 0 : index
      %c0_16 = arith.constant 0 : index
      %29 = vector.load %arg6[%c0_15, %c0_16] : memref<8x128xf32, #tpu.memory_space<vmem>>, vector<8x128xf32>
      %c0_17 = arith.constant 0 : index
      %c0_18 = arith.constant 0 : index
      %30 = vector.load %arg5[%c0_17, %c0_18] : memref<16x128xf32, #tpu.memory_space<vmem>>, vector<8x128xf32>
      tpu.vector_store %arg5[%c0_17, %c0_18], %29 {strides = array<i32>} : memref<16x128xf32, #tpu.memory_space<vmem>>, vector<8x128xf32>,
      %c0_19 = arith.constant 0 : index
      %c0_20 = arith.constant 0 : index
      %31 = vector.load %arg7[%c0_19, %c0_20] : memref<8x128xf32, #tpu.memory_space<vmem>>, vector<8x128xf32>
      %c8 = arith.constant 8 : index
      %c0_21 = arith.constant 0 : index
      %32 = vector.load %arg5[%c8, %c0_21] : memref<16x128xf32, #tpu.memory_space<vmem>>, vector<8x128xf32>
      tpu.vector_store %arg5[%c8, %c0_21], %31 {strides = array<i32>} : memref<16x128xf32, #tpu.memory_space<vmem>>, vector<8x128xf32>,
    } else {
    }
    return
  }
  func.func @transform_0(%arg0: i32, %arg1: i32) -> (i32, i32) {
    %c1_i32 = arith.constant 1 : i32
    %0 = arith.muli %arg0, %c1_i32 : i32
    %1 = arith.addi %0, %arg1 : i32
    %c0_i32 = arith.constant 0 : i32
    %2 = arith.minsi %1, %c0_i32 : i32
    %c0_i32_0 = arith.constant 0 : i32
    %c0_i32_1 = arith.constant 0 : i32
    return %2, %c0_i32_0 : i32, i32
  }
  func.func @transform_1(%arg0: i32, %arg1: i32) -> (i32, i32) {
    %c1_i32 = arith.constant 1 : i32
    %0 = arith.muli %arg0, %c1_i32 : i32
    %1 = arith.addi %0, %arg1 : i32
    %c0_i32 = arith.constant 0 : i32
    %2 = arith.minsi %1, %c0_i32 : i32
    %c0_i32_0 = arith.constant 0 : i32
    %c0_i32_1 = arith.constant 0 : i32
    return %2, %c0_i32_0 : i32, i32
  }
  func.func @transform_2(%arg0: i32, %arg1: i32) -> (i32, i32) {
    %c1_i32 = arith.constant 1 : i32
    %0 = arith.muli %arg0, %c1_i32 : i32
    %1 = arith.addi %0, %arg1 : i32
    %c0_i32 = arith.constant 0 : i32
    %2 = arith.minsi %1, %c0_i32 : i32
    %c0_i32_0 = arith.constant 0 : i32
    %c0_i32_1 = arith.constant 0 : i32
    return %2, %c0_i32_0 : i32, i32
  }
  func.func @transform_3(%arg0: i32, %arg1: i32) -> (i32, i32) {
    %c0_i32 = arith.constant 0 : i32
    %c0_i32_0 = arith.constant 0 : i32
    return %arg0, %c0_i32 : i32, i32
  }
}

</mosaic_0001>

<llo_original>
// kernel: tpu_custom_call.1
$region0: #{tpu_custom_call.1}
  #allocation0 [shape = 'u32[]', space=smem, size = 0x4, offset = 0x4, fixed_abs, tag = 'smem constant byte address 0x4 - core index']
  #allocation1 [shape = 'u32[144,128]{1,0:T(1,128)}', space=vmem, size = 0x12000, scoped, tag = 'internal scratch']
  #allocation2 [shape = 'f32[8,128]{1,0:T(8,128)}', space=vmem, size = 0x1000, scoped, tag = 'scratch operand']
  #allocation3 [shape = 'f32[8,128]{1,0:T(8,128)}', space=vmem, size = 0x1000, scoped, tag = 'scratch operand']
  %s0 = inlined_call_operand.hbm [shape: f32[16,128], index: 0, kind: input, shape index: {}]
  %s1 = inlined_call_operand.hbm [shape: f32[16,128], index: 1, kind: input, shape index: {}]
  %s2 = inlined_call_operand.hbm [shape: f32[16,128], index: 2, kind: input, shape index: {}]
  %s3 = inlined_call_operand.hbm [shape: f32[16,128], index: 3, kind: output, shape index: {}]
  %s4 = sld [smem:[#allocation0]]
  $region42: #{tpu_custom_call.1} parent=0
    _
  %s6 = ssub.s32 1, %s4
  %s7 = scalar_select 0, %s6, %s4
  $region1: #{tpu_custom_call.1} parent=0
    #allocation4 [shape = 'u8[8192]{0}', space=vmem, size = 0x2000, scoped, tag = 'input window, operand 0, single buffered']
    #allocation5 [shape = 's32[1]{0}', space=sflag, size = 0x4, scoped, tag = 'scoped memory for tpu_custom_call.1']
    #allocation6 [shape = 's32[1]{0}', space=sflag, size = 0x4, scoped, tag = 'scoped memory for tpu_custom_call.1']
    #allocation7 [shape = 'u8[8192]{0}', space=vmem, size = 0x2000, scoped, tag = 'input window, operand 1, single buffered']
    #allocation8 [shape = 's32[1]{0}', space=sflag, size = 0x4, scoped, tag = 'scoped memory for tpu_custom_call.1']
    #allocation9 [shape = 'u8[8192]{0}', space=vmem, size = 0x2000, scoped, tag = 'input window, operand 2, single buffered']
    #allocation10 [shape = 'u8[8192]{0}', space=vmem, size = 0x2000, scoped, tag = 'output window, operand 0, single buffered']
    %8 = vsyncpa [#allocation5], 0
    %9 = vsyncpa [#allocation8], 0
    %10 = vsyncpa [#allocation6], 0
    // Predicated region
    $region2: #{tpu_custom_call.1} parent=1 // pred_check
      _
    $region3: #{tpu_custom_call.1} parent=1 // pred_check_branch
      %12 = sbr.rel (0) target = $region5
    $region4: #{tpu_custom_call.1} parent=1 // pred_region
      %s13 = sadd.s32 0, 0
      %p14 = scmp.lt.s32.totalorder %s13, 0
      %s15 = scalar_select %p14, %s13, 0
      %s16 = smul.u32 2, %s15
      %s18 = ssub.s32 256, 256
      %19 = vsyncadd [#allocation5], %s18
      %s20 = smul.addr %s16, 128
      %s21 = scalar_lea.hbm %s0, %s20
      %s22 = sshll.u32 [#allocation4], 4
      %s23 = int_to_ptr.vmem [resolvable:$true] %s22
      %28 = dma.hbm_to_vmem [thread:$0]  %s21, 256, %s23, [#allocation5], 128, 128, 8
    $region5: #{tpu_custom_call.1} parent=1 // pred_fallthru
      _
    // Predicated region
    $region6: #{tpu_custom_call.1} parent=1 // pred_check
      _
    $region7: #{tpu_custom_call.1} parent=1 // pred_check_branch
      %30 = sbr.rel (0) target = $region9
    $region8: #{tpu_custom_call.1} parent=1 // pred_region
      %s31 = sadd.s32 0, 0
      %p32 = scmp.lt.s32.totalorder %s31, 0
      %s33 = scalar_select %p32, %s31, 0
      %s34 = smul.u32 2, %s33
      %s36 = ssub.s32 256, 256
      %37 = vsyncadd [#allocation8], %s36
      %s38 = smul.addr %s34, 128
      %s39 = scalar_lea.hbm %s1, %s38
      %s40 = sshll.u32 [#allocation7], 4
      %s41 = int_to_ptr.vmem [resolvable:$true] %s40
      %46 = dma.hbm_to_vmem [thread:$0]  %s39, 256, %s41, [#allocation8], 128, 128, 8
    $region9: #{tpu_custom_call.1} parent=1 // pred_fallthru
      _
    // Predicated region
    $region10: #{tpu_custom_call.1} parent=1 // pred_check
      _
    $region11: #{tpu_custom_call.1} parent=1 // pred_check_branch
      %48 = sbr.rel (0) target = $region13
    $region12: #{tpu_custom_call.1} parent=1 // pred_region
      %s49 = sadd.s32 0, 0
      %p50 = scmp.lt.s32.totalorder %s49, 0
      %s51 = scalar_select %p50, %s49, 0
      %s52 = smul.u32 2, %s51
      %s54 = ssub.s32 256, 256
      %55 = vsyncadd [#allocation8], %s54
      %s56 = smul.addr %s52, 128
      %s57 = scalar_lea.hbm %s2, %s56
      %s58 = sshll.u32 [#allocation9], 4
      %s59 = int_to_ptr.vmem [resolvable:$true] %s58
      %64 = dma.hbm_to_vmem [thread:$0]  %s57, 256, %s59, [#allocation8], 128, 128, 8
    $region13: #{tpu_custom_call.1} parent=1 // pred_fallthru
      _
    // Predicated region
    $region14: #{tpu_custom_call.1} parent=1 // pred_check
      _
    $region15: #{tpu_custom_call.1} parent=1 // pred_check_branch
      %66 = sbr.rel (0) target = $region17
    $region16: #{tpu_custom_call.1} parent=1 // pred_region
      %67 = dma.done [#allocation5], 256
    $region17: #{tpu_custom_call.1} parent=1 // pred_fallthru
      _
    // Predicated region
    $region18: #{tpu_custom_call.1} parent=1 // pred_check
      _
    $region19: #{tpu_custom_call.1} parent=1 // pred_check_branch
      %69 = sbr.rel (0) target = $region21
    $region20: #{tpu_custom_call.1} parent=1 // pred_region
      %70 = dma.done [#allocation8], 256
    $region21: #{tpu_custom_call.1} parent=1 // pred_fallthru
      _
    // Predicated region
    $region22: #{tpu_custom_call.1} parent=1 // pred_check
      _
    $region23: #{tpu_custom_call.1} parent=1 // pred_check_branch
      %72 = sbr.rel (0) target = $region25
    $region24: #{tpu_custom_call.1} parent=1 // pred_region
      %73 = dma.done [#allocation8], 256
    $region25: #{tpu_custom_call.1} parent=1 // pred_fallthru
      _
    %s74 = sadd.s32 0, 0
    %p75 = scmp.lt.s32.totalorder %s74, 0
    %s76 = scalar_select %p75, %s74, 0
    %s77 = smul.u32 2, %s76
    %s78 = sadd.s32 0, 0
    %p79 = scmp.lt.s32.totalorder %s78, 0
    %s80 = scalar_select %p79, %s78, 0
    %s81 = smul.u32 2, %s80
    %s82 = sadd.s32 0, 0
    %p83 = scmp.lt.s32.totalorder %s82, 0
    %s84 = scalar_select %p83, %s82, 0
    %s85 = smul.u32 2, %s84
    %p86 = scmp.eq.s32.totalorder 0, 0
    // Predicated region
    $region26: #{tpu_custom_call.1} parent=1 // pred_check
      %p87 = pneg %p86
    $region27: #{tpu_custom_call.1} parent=1 // pred_check_branch
      %89 = sbr.rel (%p87) target = $region29
    $region28: #{tpu_custom_call.1} parent=1 // pred_region
      %90 = vst [vmem:[#allocation2] sm:$0xff] 0.0
      %91 = vst [vmem:[#allocation3] sm:$0xff] 0.0
    $region29: #{tpu_custom_call.1} parent=1 // pred_fallthru
      _
    %v92 = vld [vmem:[#allocation2] sm:$0xff]
    %v93 = vld [vmem:[#allocation3] sm:$0xff]
    %v94 = vld [vmem:[#allocation4] sm:$0xff]
    %v95 = vld [vmem:[#allocation4 + $0x8] sm:$0xff]
    %v96 = vld [vmem:[#allocation7] sm:$0xff]
    %v97 = vld [vmem:[#allocation7 + $0x8] sm:$0xff]
    %v98 = vld [vmem:[#allocation9] sm:$0xff]
    %v99 = vld [vmem:[#allocation9 + $0x8] sm:$0xff]
    %v100 = vsub.f32 %v94, %v96
    %v101 = vsub.f32 %v95, %v97
    %v102 = vmul.f32 %v98, %v100
    %v103 = vmul.f32 %v99, %v101
    %v104 = vmul.f32 %v102, %v100
    %v105 = vmul.f32 %v103, %v101
    %v106 = vmul.f32 %v98, %v96
    %v107 = vmul.f32 %v99, %v97
    %v108 = vmul.f32 %v106, %v96
    %v109 = vmul.f32 %v107, %v97
    %v110 = vadd.f32 %v104, %v105
    %v111 = vadd.f32 %v92, %v110
    %v112 = vadd.f32 %v108, %v109
    %v113 = vadd.f32 %v93, %v112
    %114 = vst [vmem:[#allocation2] sm:$0xff] %v111
    %115 = vst [vmem:[#allocation3] sm:$0xff] %v113
    // Predicated region
    $region30: #{tpu_custom_call.1} parent=1 // pred_check
      %p116 = pneg %p86
    $region31: #{tpu_custom_call.1} parent=1 // pred_check_branch
      %118 = sbr.rel (%p116) target = $region33
    $region32: #{tpu_custom_call.1} parent=1 // pred_region
      %v119 = vld [vmem:[#allocation2] sm:$0xff]
      %120 = vst [vmem:[#allocation10] sm:$0xff] %v119
      %v121 = vld [vmem:[#allocation3] sm:$0xff]
      %122 = vst [vmem:[#allocation10 + $0x8] sm:$0xff] %v121
    $region33: #{tpu_custom_call.1} parent=1 // pred_fallthru
      _
    // Predicated region
    $region34: #{tpu_custom_call.1} parent=1 // pred_check
      _
    $region35: #{tpu_custom_call.1} parent=1 // pred_check_branch
      %124 = sbr.rel (0) target = $region37
    $region36: #{tpu_custom_call.1} parent=1 // pred_region
      %s126 = ssub.s32 256, 256
      %127 = vsyncadd [#allocation6], %s126
      %s128 = sshll.u32 [#allocation10], 4
      %s129 = int_to_ptr.vmem [resolvable:$true] %s128
      %134 = dma.vmem_to_hbm [thread:$0]  %s129, 256, %s3, [#allocation6], 128, 128, 8
    $region37: #{tpu_custom_call.1} parent=1 // pred_fallthru
      _
    // Predicated region
    $region38: #{tpu_custom_call.1} parent=1 // pred_check
      _
    $region39: #{tpu_custom_call.1} parent=1 // pred_check_branch
      %136 = sbr.rel (0) target = $region41
    $region40: #{tpu_custom_call.1} parent=1 // pred_region
      %137 = dma.done [#allocation6], 256
    $region41: #{tpu_custom_call.1} parent=1 // pred_fallthru
      _
    %138 = vsyncpa [#allocation5], 1
    %139 = vsyncpa [#allocation8], 1
    %140 = vsyncpa [#allocation6], 1

</llo_original>
